<compile_context>
chip_gen: v7x
topology: tpu7x:2x2x1
jax: 0.10.0
libtpu: 0.0.40
codegen_flags: <defaults>
</compile_context>

<pallas_src>
import math

import numpy as np
import jax
import jax.numpy as jnp
from jax import lax
from jax.experimental import pallas as pl
from jax.experimental.pallas import tpu as pltpu


def _glad_attn_kernel(h_ref, lens_ref, m_ref, u_ref, mix_ref, c_ref):
    """Fused local+global self-attention context for one batch block.

    h_ref    : (Bb, T, D)  blended RNN hidden states, native dtype (padded rows are 0)
    lens_ref : (Bb, 1) i32 valid lengths (0 for batch-pad rows)
    m_ref    : (D, 2D) f32 stacked [Wk_loc^T Wq_loc | Wk_glob^T Wq_glob]
    u_ref    : (1, 2D) f32 stacked [T*bk_loc@Wq_loc | T*bk_glob@Wq_glob]
    mix_ref  : (1,)    f32 SMEM scalar: beta = sigmoid(beta_raw[slot])
    c_ref    : (Bb, D) f32 blended context output
    """
    # Upcast once after the DMA (bf16 ingestion keeps HBM bytes low; f32 compute keeps
    # v5e off the emulated-bf16 path and the tolerance tight).
    h = h_ref[...].astype(jnp.float32)                       # (Bb, T, D)
    bb, seq, d = h.shape
    inv_sqrt_d = 1.0 / math.sqrt(d)

    # Query-position validity.  Keys are intentionally NOT masked, matching PyTorch
    # (scores = attention.sum(dim=2) over ALL key positions).
    t_idx = lax.broadcasted_iota(jnp.int32, (bb, seq), 1)
    valid = t_idx < lens_ref[...]                            # (Bb, T)

    xsum = jnp.sum(h, axis=1)                                # (Bb, D), sublane reduce (XLU)

    # Both branches' score vectors with ONE MXU call on the stacked weights:
    #   v = Wq^T (Wk xsum + T bk)  ==  xsum @ M + u          (per branch)
    v_both = jnp.dot(xsum, m_ref[...],
                     preferred_element_type=jnp.float32) + u_ref[...]   # (Bb, 2D)
    v_loc, v_glob = v_both[:, :d], v_both[:, d:]

    def softmax_probs(v):
        # VPU multiply + XLU lane reduce: no per-batch-row M=1 MXU pushes, no per-row
        # XLU transposes of the (T, D) slab.
        s = jnp.sum(h * v[:, None, :], axis=-1) * inv_sqrt_d             # (Bb, T)
        s = jnp.where(valid, s, -jnp.inf)
        # Clamps make len==0 rows (batch padding) yield a zero context instead of NaN;
        # exact no-ops for rows with >= 1 valid position.
        m = jnp.maximum(jnp.max(s, axis=-1, keepdims=True), -1e30)
        e = jnp.exp(s - m)                                               # EUP
        denom = jnp.maximum(jnp.sum(e, axis=-1, keepdims=True), 1e-20)
        return e / denom                                                 # (Bb, T)

    beta = mix_ref[0]
    # Blend probabilities first (exact: beta is a scalar outside the softmax), so the
    # context is a SINGLE weighted pass over h (sublane reduce) instead of two.
    p_mix = beta * softmax_probs(v_loc) + (1.0 - beta) * softmax_probs(v_glob)
    c_ref[...] = jnp.sum(h * p_mix[:, :, None], axis=1).astype(c_ref.dtype)


def _vmem_capacity_bytes():
    try:
        return int(pltpu.get_tpu_info().vmem_capacity_bytes)
    except Exception:
        return 64 << 20      # conservative fallback: v7x-class per-TC VMEM


def _plan_batch_tiling(batch, seq, d, h_itemsize):
    """Return (padded_batch, bb).

    bb is a multiple of 8 (f32 sublane) that divides padded_batch, targets ~2-4 MiB of
    h per grid step under a generation-aware VMEM budget, and leaves >= 2 grid steps
    whenever the batch allows it (so dimension_semantics=("parallel",) can shard the
    batch axis across both v7x TensorCores).  No arbitrary-divisor / bb=1 fallback.
    """
    cap = _vmem_capacity_bytes()
    budget = max(6 << 20, min(cap // 4, 20 << 20))          # well under the scoped limit
    row_f32 = seq * d * 4
    # Per-batch-row footprint: double-buffered native-dtype h block + ~4 f32 (T,D)
    # in-kernel temporaries + double-buffered out rows.
    per_row = 2 * seq * d * h_itemsize + 4 * row_f32 + 4 * d * 4
    const_bytes = 2 * (d * 2 * d * 4) + 4 * 2 * d * 4 + (64 << 10)      # M, u, slack
    budget_rows = max(2 << 20, budget - const_bytes)

    bb = (4 << 20) // max(row_f32, 1)                       # ~4 MiB (f32-equiv) of h/step
    bb = min(bb, budget_rows // max(per_row, 1))
    bb = max(8, (bb // 8) * 8)

    b8 = max(8, ((batch + 7) // 8) * 8)
    if b8 > 8:
        bb = min(bb, max(8, (b8 // 2 // 8) * 8))            # guarantee >= 2 grid steps
    else:
        bb = 8
    # Prefer a multiple-of-8 divisor of b8 near the target to avoid padding waste.
    best = 8
    for cand in range(8, bb + 1, 8):
        if b8 % cand == 0:
            best = cand
    if 2 * best >= bb:
        bb = best
    padded = ((b8 + bb - 1) // bb) * bb
    return padded, bb


def glad_encoder_attention(h, x_len, params, slot):
    """Pallas forward of the GLAD encoder attention stage.

    h: (B, T, D) blended BiLSTM hidden states (D = din = 2*dhid), native dtype
    (f32 or bf16); x_len: (B,) ints.  Returns (h, c) with c: (B, D) f32, matching the
    (h, c) return of the PyTorch module (h is a passthrough — see TODO at top).
    """
    B, T, D = h.shape
    wq_l, bq_l, wk_l, bk_l = params["local"][slot]
    wq_g, bq_g, wk_g, bk_g = params["global"]
    beta = jax.nn.sigmoid(params["beta_raw"][params["slots"].index(slot)])

    f32 = jnp.float32
    # One-time wrapper-side weight pre-combination: the whole q/k machinery collapses to
    # M = Wk^T @ Wq and u = T*bk @ Wq per branch; local/global stacked along the output
    # dim so the kernel does a single MXU call (and a single constant-block DMA stream).
    m_both = jnp.concatenate([wk_l.T @ wq_l, wk_g.T @ wq_g], axis=1).astype(f32)  # (D,2D)
    u_both = jnp.concatenate([(float(T) * bk_l) @ wq_l,
                              (float(T) * bk_g) @ wq_g]).reshape(1, 2 * D).astype(f32)
    mix = jnp.reshape(beta, (1,)).astype(f32)               # beta scalar via SMEM

    lens2d = x_len.astype(jnp.int32).reshape(B, 1)
    Bp, bb = _plan_batch_tiling(B, T, D, h.dtype.itemsize)
    if Bp != B:
        # Pad the batch (zero rows, zero lengths -> zero context rows, sliced off below)
        # instead of shrinking bb to an arbitrary divisor of B.
        h_in = jnp.pad(h, ((0, Bp - B), (0, 0), (0, 0)))
        lens_in = jnp.pad(lens2d, ((0, Bp - B), (0, 0)))
    else:
        h_in, lens_in = h, lens2d

    cap = _vmem_capacity_bytes()
    # v5e/v6e (128 MiB physical) -> 64 MiB scope; v7x (64 MiB physical) -> 32 MiB scope.
    vmem_limit = int(min(max(cap // 2, 32 << 20), 64 << 20))

    cost = pl.CostEstimate(
        flops=int(9 * Bp * T * D + 4 * Bp * D * D),
        transcendentals=int(2 * Bp * T),
        bytes_accessed=int(Bp * T * D * h.dtype.itemsize + Bp * (D + 1) * 4
                           + (2 * D * D + 2 * D + 1) * 4),
    )

    c = pl.pallas_call(
        _glad_attn_kernel,
        out_shape=jax.ShapeDtypeStruct((Bp, D), f32),
        grid=(Bp // bb,),
        in_specs=[
            pl.BlockSpec((bb, T, D), lambda i: (i, 0, 0)),        # h (native dtype)
            pl.BlockSpec((bb, 1), lambda i: (i, 0)),              # lengths
            pl.BlockSpec((D, 2 * D), lambda i: (0, 0)),           # stacked M (constant)
            pl.BlockSpec((1, 2 * D), lambda i: (0, 0)),           # stacked u (constant)
            pl.BlockSpec(memory_space=pltpu.MemorySpace.SMEM),    # beta scalar in SMEM
        ],
        out_specs=pl.BlockSpec((bb, D), lambda i: (i, 0)),        # lane-dense (bb, D)
        compiler_params=pltpu.CompilerParams(
            dimension_semantics=("parallel",),                    # megacore split on v7x
            vmem_limit_bytes=vmem_limit),
        cost_estimate=cost,
    )(h_in, lens_in, m_both, u_both, mix)

    return h, c[:B]


# ------------------------- pure-JAX reference (faithful math) -------------------------
def _reference_forward(h, x_len, params, slot):
    B, T, D = h.shape
    beta = jax.nn.sigmoid(params["beta_raw"][params["slots"].index(slot)])
    mask = jnp.arange(T)[None, :] < x_len[:, None]               # (B, T)

    def selfattn_transformer_v2(hh, wq, bq, wk, bk):
        q = jnp.einsum("btd,ed->bte", hh, wq) + bq
        k = jnp.einsum("btd,ed->bte", hh, wk) + bk
        att = jnp.einsum("bte,bse->bts", q, k) / math.sqrt(D)
        scores = att.sum(axis=2)                                 # sums over ALL keys
        scores = jnp.where(mask, scores, -jnp.inf)
        p = jax.nn.softmax(scores, axis=1)
        return jnp.einsum("bt,btd->bd", p, hh)

    c_local = selfattn_transformer_v2(h, *params["local"][slot])
    c_global = selfattn_transformer_v2(h, *params["global"])
    c = beta * c_local + (1.0 - beta) * c_global
    return h, c


# ------------------------------ parameter construction --------------------------------
def init_params(key, din, dhid, slots):
    """PyTorch-layout parameters (Linear: y = x @ W^T + b) for the attention stage."""
    assert din == 2 * dhid, "GLAD: local/global attention widths must both equal din"
    D = din

    def linear(k, fan_in, fan_out):
        kw, kb = jax.random.split(k)
        bound = 1.0 / math.sqrt(fan_in)
        w = jax.random.uniform(kw, (fan_out, fan_in), jnp.float32, -bound, bound)
        b = jax.random.uniform(kb, (fan_out,), jnp.float32, -bound, bound)
        return w, b

    keys = jax.random.split(key, 3 + 2 * len(slots))
    wq_g, bq_g = linear(keys[0], D, D)
    wk_g, bk_g = linear(keys[1], D, D)
    params = {
        "slots": list(slots),
        "global": (wq_g, bq_g, wk_g, bk_g),
        "beta_raw": jax.random.uniform(keys[2], (len(slots),), jnp.float32,
                                       -0.01, 0.01),
        "local": {},
    }
    for i, s in enumerate(slots):
        wq, bq = linear(keys[3 + 2 * i], D, D)
        wk, bk = linear(keys[4 + 2 * i], D, D)
        params["local"][s] = (wq, bq, wk, bk)
    return params


if __name__ == "__main__":
    # small shapes: batch=2, seq=8, dhid=16 -> D = din = 32
    B, T, dhid = 2, 8, 16
    din = 2 * dhid
    slots = ["food", "area", "price"]

    key = jax.random.PRNGKey(0)
    k_h, k_p = jax.random.split(key)
    x_len = jnp.array([T, 5], dtype=jnp.int32)            # second sequence is padded
    # h plays the role of the blended BiLSTM output; pad_packed_sequence zero-pads,
    # so rows past each sequence length are zeroed for fidelity.
    h = jax.random.normal(k_h, (B, T, din), dtype=jnp.float32)
    h = h * (jnp.arange(T)[None, :, None] < x_len[:, None, None])
    params = init_params(k_p, din, dhid, slots)

    h_out, c = glad_encoder_attention(h, x_len, params, slot="food")
    jax.block_until_ready(c)

    h_ref, c_ref = _reference_forward(h, x_len, params, slot="food")
    # 1e-4: the kernel's algebraic rewrite (q . sum_k scores, precombined Wk^T Wq,
    # dropped softmax-invariant bq term, blended-probability single context pass)
    # changes floating-point reduction order vs the explicit q @ k^T reference.
    np.testing.assert_allclose(np.asarray(c), np.asarray(c_ref), rtol=1e-4, atol=1e-4)
    np.testing.assert_allclose(np.asarray(h_out), np.asarray(h))

    print("KERNEL_OK")
</pallas_src>

<mosaic_0001>
module attributes {stable_mosaic.version = 11 : i64} {
  func.func @_glad_attn_kernel(%arg0: i32, %arg1: memref<8x8x32xf32, #tpu.memory_space<vmem>>, %arg2: memref<8x1xi32, #tpu.memory_space<vmem>>, %arg3: memref<32x64xf32, #tpu.memory_space<vmem>>, %arg4: memref<1x64xf32, #tpu.memory_space<vmem>>, %arg5: memref<1xf32, #tpu.memory_space<smem>>, %arg6: memref<8x32xf32, #tpu.memory_space<vmem>>) attributes {dimension_semantics = [#tpu.dimension_semantics<parallel>], iteration_bounds = array<i64: 1>, scalar_prefetch = 0 : i64, scratch_operands = 0 : i64, tpu.core_type = #tpu.core_type<tc>, window_params = [{transform_indices = @transform_0, window_bounds = array<i64: 8, 8, 32>}, {transform_indices = @transform_1, window_bounds = array<i64: 8, 1>}, {pipeline_mode = #tpu.pipeline_mode<synchronous>, transform_indices = @transform_2, window_bounds = array<i64: 32, 64>}, {pipeline_mode = #tpu.pipeline_mode<synchronous>, transform_indices = @transform_3, window_bounds = array<i64: 1, 64>}, {transform_indices = @transform_4, window_bounds = array<i64: 1>}, {transform_indices = @transform_5, window_bounds = array<i64: 8, 32>}]} {
    %c0 = arith.constant 0 : index
    %c0_0 = arith.constant 0 : index
    %c0_1 = arith.constant 0 : index
    %0 = vector.load %arg1[%c0, %c0_0, %c0_1] : memref<8x8x32xf32, #tpu.memory_space<vmem>>, vector<8x8x32xf32>
    %1 = tpu.iota {dimensions = array<i32: 1>} : vector<8x8xi32>
    %c0_2 = arith.constant 0 : index
    %c0_3 = arith.constant 0 : index
    %2 = vector.load %arg2[%c0_2, %c0_3] : memref<8x1xi32, #tpu.memory_space<vmem>>, vector<8x1xi32>
    %3 = vector.broadcast %2 : vector<8x1xi32> to vector<8x8xi32>
    %4 = arith.cmpi slt, %1, %3 : vector<8x8xi32>
    %cst = arith.constant dense<0.000000e+00> : vector<8x32xf32>
    %5 = vector.multi_reduction <add>, %0, %cst [1] : vector<8x8x32xf32> to vector<8x32xf32>
    %c0_4 = arith.constant 0 : index
    %c0_5 = arith.constant 0 : index
    %6 = vector.load %arg3[%c0_4, %c0_5] : memref<32x64xf32, #tpu.memory_space<vmem>>, vector<32x64xf32>
    %cst_6 = arith.constant dense<0.000000e+00> : vector<8x64xf32>
    %7 = tpu.matmul %5, %6, %cst_6 {dimension_numbers = #tpu.dot_dimension_numbers<[1], [0], [0], [1], [0, 0, 1, 1], [], []>} : vector<8x32xf32>, vector<32x64xf32>, vector<8x64xf32> -> vector<8x64xf32>
    %c0_7 = arith.constant 0 : index
    %c0_8 = arith.constant 0 : index
    %8 = vector.load %arg4[%c0_7, %c0_8] : memref<1x64xf32, #tpu.memory_space<vmem>>, vector<1x64xf32>
    %9 = vector.broadcast %8 : vector<1x64xf32> to vector<8x64xf32>
    %10 = arith.addf %7, %9 : vector<8x64xf32>
    %11 = vector.extract_strided_slice %10 {offsets = [0, 0], sizes = [8, 32], strides = [1, 1]} : vector<8x64xf32> to vector<8x32xf32>
    %12 = vector.extract_strided_slice %10 {offsets = [0, 32], sizes = [8, 32], strides = [1, 1]} : vector<8x64xf32> to vector<8x32xf32>
    %c0_9 = arith.constant 0 : index
    %13 = memref.load %arg5[%c0_9] : memref<1xf32, #tpu.memory_space<smem>>
    %14 = vector.shape_cast %11 : vector<8x32xf32> to vector<8x1x32xf32>
    %15 = vector.broadcast %14 : vector<8x1x32xf32> to vector<8x8x32xf32>
    %16 = arith.mulf %0, %15 : vector<8x8x32xf32>
    %cst_10 = arith.constant dense<0.000000e+00> : vector<8x8xf32>
    %17 = vector.multi_reduction <add>, %16, %cst_10 [2] : vector<8x8x32xf32> to vector<8x8xf32>
    %cst_11 = arith.constant 0.176776692 : f32
    %18 = vector.broadcast %cst_11 : f32 to vector<8x8xf32>
    %19 = arith.mulf %17, %18 : vector<8x8xf32>
    %cst_12 = arith.constant 0xFF800000 : f32
    %20 = vector.broadcast %cst_12 : f32 to vector<8x8xf32>
    %21 = arith.select %4, %19, %20 : vector<8x8xi1>, vector<8x8xf32>
    %cst_13 = arith.constant dense<0xFF800000> : vector<8xf32>
    %22 = vector.multi_reduction <maximumf>, %21, %cst_13 [1] : vector<8x8xf32> to vector<8xf32>
    %23 = vector.shape_cast %22 : vector<8xf32> to vector<8x1xf32>
    %cst_14 = arith.constant -1.000000e+30 : f32
    %24 = vector.broadcast %cst_14 : f32 to vector<8x1xf32>
    %25 = arith.maximumf %23, %24 : vector<8x1xf32>
    %26 = vector.broadcast %25 : vector<8x1xf32> to vector<8x8xf32>
    %27 = arith.subf %21, %26 : vector<8x8xf32>
    %28 = math.exp %27 : vector<8x8xf32>
    %cst_15 = arith.constant dense<0.000000e+00> : vector<8xf32>
    %29 = vector.multi_reduction <add>, %28, %cst_15 [1] : vector<8x8xf32> to vector<8xf32>
    %30 = vector.shape_cast %29 : vector<8xf32> to vector<8x1xf32>
    %cst_16 = arith.constant 9.99999968E-21 : f32
    %31 = vector.broadcast %cst_16 : f32 to vector<8x1xf32>
    %32 = arith.maximumf %30, %31 : vector<8x1xf32>
    %33 = vector.broadcast %32 : vector<8x1xf32> to vector<8x8xf32>
    %34 = arith.divf %28, %33 : vector<8x8xf32>
    %35 = vector.broadcast %13 : f32 to vector<8x8xf32>
    %36 = arith.mulf %35, %34 : vector<8x8xf32>
    %cst_17 = arith.constant 1.000000e+00 : f32
    %37 = arith.subf %cst_17, %13 : f32
    %38 = vector.shape_cast %12 : vector<8x32xf32> to vector<8x1x32xf32>
    %39 = vector.broadcast %38 : vector<8x1x32xf32> to vector<8x8x32xf32>
    %40 = arith.mulf %0, %39 : vector<8x8x32xf32>
    %cst_18 = arith.constant dense<0.000000e+00> : vector<8x8xf32>
    %41 = vector.multi_reduction <add>, %40, %cst_18 [2] : vector<8x8x32xf32> to vector<8x8xf32>
    %cst_19 = arith.constant 0.176776692 : f32
    %42 = vector.broadcast %cst_19 : f32 to vector<8x8xf32>
    %43 = arith.mulf %41, %42 : vector<8x8xf32>
    %cst_20 = arith.constant 0xFF800000 : f32
    %44 = vector.broadcast %cst_20 : f32 to vector<8x8xf32>
    %45 = arith.select %4, %43, %44 : vector<8x8xi1>, vector<8x8xf32>
    %cst_21 = arith.constant dense<0xFF800000> : vector<8xf32>
    %46 = vector.multi_reduction <maximumf>, %45, %cst_21 [1] : vector<8x8xf32> to vector<8xf32>
    %47 = vector.shape_cast %46 : vector<8xf32> to vector<8x1xf32>
    %cst_22 = arith.constant -1.000000e+30 : f32
    %48 = vector.broadcast %cst_22 : f32 to vector<8x1xf32>
    %49 = arith.maximumf %47, %48 : vector<8x1xf32>
    %50 = vector.broadcast %49 : vector<8x1xf32> to vector<8x8xf32>
    %51 = arith.subf %45, %50 : vector<8x8xf32>
    %52 = math.exp %51 : vector<8x8xf32>
    %cst_23 = arith.constant dense<0.000000e+00> : vector<8xf32>
    %53 = vector.multi_reduction <add>, %52, %cst_23 [1] : vector<8x8xf32> to vector<8xf32>
    %54 = vector.shape_cast %53 : vector<8xf32> to vector<8x1xf32>
    %cst_24 = arith.constant 9.99999968E-21 : f32
    %55 = vector.broadcast %cst_24 : f32 to vector<8x1xf32>
    %56 = arith.maximumf %54, %55 : vector<8x1xf32>
    %57 = vector.broadcast %56 : vector<8x1xf32> to vector<8x8xf32>
    %58 = arith.divf %52, %57 : vector<8x8xf32>
    %59 = vector.broadcast %37 : f32 to vector<8x8xf32>
    %60 = arith.mulf %59, %58 : vector<8x8xf32>
    %61 = arith.addf %36, %60 : vector<8x8xf32>
    %62 = vector.shape_cast %61 : vector<8x8xf32> to vector<8x8x1xf32>
    %63 = vector.broadcast %62 : vector<8x8x1xf32> to vector<8x8x32xf32>
    %64 = arith.mulf %0, %63 : vector<8x8x32xf32>
    %cst_25 = arith.constant dense<0.000000e+00> : vector<8x32xf32>
    %65 = vector.multi_reduction <add>, %64, %cst_25 [1] : vector<8x8x32xf32> to vector<8x32xf32>
    %c0_26 = arith.constant 0 : index
    %c0_27 = arith.constant 0 : index
    %66 = vector.load %arg6[%c0_26, %c0_27] : memref<8x32xf32, #tpu.memory_space<vmem>>, vector<8x32xf32>
    tpu.vector_store %arg6[%c0_26, %c0_27], %65 {strides = array<i32>} : memref<8x32xf32, #tpu.memory_space<vmem>>, vector<8x32xf32>,
    return
  }
  func.func @transform_0(%arg0: i32) -> (i32, i32, i32) {
    %c0_i32 = arith.constant 0 : i32
    %c0_i32_0 = arith.constant 0 : i32
    %c0_i32_1 = arith.constant 0 : i32
    return %arg0, %c0_i32, %c0_i32_0 : i32, i32, i32
  }
  func.func @transform_1(%arg0: i32) -> (i32, i32) {
    %c0_i32 = arith.constant 0 : i32
    %c0_i32_0 = arith.constant 0 : i32
    return %arg0, %c0_i32 : i32, i32
  }
  func.func @transform_2(%arg0: i32) -> (i32, i32) {
    %c0_i32 = arith.constant 0 : i32
    %c0_i32_0 = arith.constant 0 : i32
    %c0_i32_1 = arith.constant 0 : i32
    return %c0_i32, %c0_i32_0 : i32, i32
  }
  func.func @transform_3(%arg0: i32) -> (i32, i32) {
    %c0_i32 = arith.constant 0 : i32
    %c0_i32_0 = arith.constant 0 : i32
    %c0_i32_1 = arith.constant 0 : i32
    return %c0_i32, %c0_i32_0 : i32, i32
  }
  func.func @transform_4(%arg0: i32) -> i32 {
    %c0_i32 = arith.constant 0 : i32
    %c0_i32_0 = arith.constant 0 : i32
    return %c0_i32 : i32
  }
  func.func @transform_5(%arg0: i32) -> (i32, i32) {
    %c0_i32 = arith.constant 0 : i32
    %c0_i32_0 = arith.constant 0 : i32
    return %arg0, %c0_i32 : i32, i32
  }
}

</mosaic_0001>

<llo_original>
// kernel: tpu_custom_call.1
$region0: #{tpu_custom_call.1}
  #allocation0 [shape = 'u32[]', space=smem, size = 0x4, offset = 0x4, fixed_abs, tag = 'smem constant byte address 0x4 - core index']
  #allocation1 [shape = 'u32[144,128]{1,0:T(1,128)}', space=vmem, size = 0x12000, scoped, tag = 'internal scratch']
  #allocation2 [shape = 'f32[1]{0:T(128)S(6)}', space=smem, size = 0x200, scoped, tag = 'scoped memory for tpu_custom_call.1']
  %s0 = inlined_call_operand.hbm [shape: f32[8,8,32], index: 0, kind: input, shape index: {}]
  %s1 = inlined_call_operand.vmem [shape: s32[8,1], index: 1, kind: input, shape index: {}]
  %s2 = inlined_call_operand.hbm [shape: f32[32,64], index: 2, kind: input, shape index: {}]
  %s3 = inlined_call_operand.vmem [shape: f32[1,64], index: 3, kind: input, shape index: {}]
  %s4 = inlined_call_operand.<no memory space> [shape: f32[1], index: 4, kind: input, shape index: {}]
  %s5 = inlined_call_operand.hbm [shape: f32[8,32], index: 5, kind: output, shape index: {}]
  %s6 = sld [smem:[#allocation0]]
  $region38: #{tpu_custom_call.1} parent=0
    _
  %s8 = ssub.s32 1, %s6
  %s9 = scalar_select 0, %s8, %s6
  %10 = sst [smem:[#allocation2]] %s4
  $region1: #{tpu_custom_call.1} parent=0
    #allocation3 [shape = 'u8[32768]{0}', space=vmem, size = 0x8000, scoped, tag = 'input window, operand 0, single buffered']
    #allocation4 [shape = 's32[1]{0}', space=sflag, size = 0x4, scoped, tag = 'scoped memory for tpu_custom_call.1']
    #allocation5 [shape = 's32[1]{0}', space=sflag, size = 0x4, scoped, tag = 'scoped memory for tpu_custom_call.1']
    #allocation6 [shape = 'u8[16384]{0}', space=vmem, size = 0x4000, scoped, tag = 'input window, operand 2, single buffered']
    #allocation7 [shape = 's32[1]{0}', space=sflag, size = 0x4, scoped, tag = 'scoped memory for tpu_custom_call.1']
    #allocation8 [shape = 'u8[4096]{0}', space=vmem, size = 0x1000, scoped, tag = 'output window, operand 0, single buffered']
    %11 = vsyncpa [#allocation4], 0
    %12 = vsyncpa [#allocation7], 0
    %13 = vsyncpa [#allocation5], 0
    // Predicated region
    $region2: #{tpu_custom_call.1} parent=1 // pred_check
      _
    $region3: #{tpu_custom_call.1} parent=1 // pred_check_branch
      %15 = sbr.rel (0) target = $region5
    $region4: #{tpu_custom_call.1} parent=1 // pred_region
      %s17 = ssub.s32 1024, 1024
      %18 = vsyncadd [#allocation4], %s17
      %s19 = sshll.u32 [#allocation3], 4
      %s20 = int_to_ptr.vmem [resolvable:$true] %s19
      %25 = dma.hbm_to_vmem [thread:$0]  %s0, 1024, %s20, [#allocation4], 128, 128, 8
    $region5: #{tpu_custom_call.1} parent=1 // pred_fallthru
      _
    // Predicated region
    $region6: #{tpu_custom_call.1} parent=1 // pred_check
      _
    $region7: #{tpu_custom_call.1} parent=1 // pred_check_branch
      %27 = sbr.rel (0) target = $region9
    $region8: #{tpu_custom_call.1} parent=1 // pred_region
      _
    $region9: #{tpu_custom_call.1} parent=1 // pred_fallthru
      _
    // Predicated region
    $region10: #{tpu_custom_call.1} parent=1 // pred_check
      _
    $region11: #{tpu_custom_call.1} parent=1 // pred_check_branch
      %29 = sbr.rel (0) target = $region13
    $region12: #{tpu_custom_call.1} parent=1 // pred_region
      %s31 = ssub.s32 512, 512
      %32 = vsyncadd [#allocation7], %s31
      %s33 = sshll.u32 [#allocation6], 4
      %s34 = int_to_ptr.vmem [resolvable:$true] %s33
      %39 = dma.hbm_to_vmem [thread:$0]  %s2, 512, %s34, [#allocation7], 128, 128, 8
    $region13: #{tpu_custom_call.1} parent=1 // pred_fallthru
      _
    // Predicated region
    $region14: #{tpu_custom_call.1} parent=1 // pred_check
      _
    $region15: #{tpu_custom_call.1} parent=1 // pred_check_branch
      %41 = sbr.rel (0) target = $region17
    $region16: #{tpu_custom_call.1} parent=1 // pred_region
      _
    $region17: #{tpu_custom_call.1} parent=1 // pred_fallthru
      _
    // Predicated region
    $region18: #{tpu_custom_call.1} parent=1 // pred_check
      _
    $region19: #{tpu_custom_call.1} parent=1 // pred_check_branch
      %43 = sbr.rel (0) target = $region21
    $region20: #{tpu_custom_call.1} parent=1 // pred_region
      _
    $region21: #{tpu_custom_call.1} parent=1 // pred_fallthru
      _
    // Predicated region
    $region22: #{tpu_custom_call.1} parent=1 // pred_check
      _
    $region23: #{tpu_custom_call.1} parent=1 // pred_check_branch
      %45 = sbr.rel (0) target = $region25
    $region24: #{tpu_custom_call.1} parent=1 // pred_region
      %46 = dma.done [#allocation4], 1024
    $region25: #{tpu_custom_call.1} parent=1 // pred_fallthru
      _
    // Predicated region
    $region26: #{tpu_custom_call.1} parent=1 // pred_check
      _
    $region27: #{tpu_custom_call.1} parent=1 // pred_check_branch
      %48 = sbr.rel (0) target = $region29
    $region28: #{tpu_custom_call.1} parent=1 // pred_region
      %49 = dma.done [#allocation7], 512
    $region29: #{tpu_custom_call.1} parent=1 // pred_fallthru
      _
    %v50 = vld [vmem:[#allocation3] sm:$0xff]
    %v51 = vld [vmem:[#allocation3 + $0x8] sm:$0xff]
    %v52 = vld [vmem:[#allocation3 + $0x10] sm:$0xff]
    %v53 = vld [vmem:[#allocation3 + $0x18] sm:$0xff]
    %v54 = vld [vmem:[#allocation3 + $0x20] sm:$0xff]
    %v55 = vld [vmem:[#allocation3 + $0x28] sm:$0xff]
    %v56 = vld [vmem:[#allocation3 + $0x30] sm:$0xff]
    %v57 = vld [vmem:[#allocation3 + $0x38] sm:$0xff]
    %v58 = vlaneseq
    %v59 = vand.u32 %v58, 127
    %v60 = vld [vmem:[%s1] sm:$0xff]
    %61 = vset.pattern.permute.xlu0 0
    %62 = vperm.xlu0 %61, %v60
    %v63 = vpop.permute.xlu0 %62
    %vm64 = vcmp.lt.s32.totalorder %v59, %v63
    %vm65 = vcmask 261120
    %v66 = vsel %vm65, %v50, 0.0
    %v67 = vrot.slane %v66, 4
    %v68 = vadd.f32 %v66, %v67
    %v69 = vrot.slane %v68, 2
    %v70 = vadd.f32 %v68, %v69
    %v71 = vrot.slane %v70, 1
    %v72 = vadd.f32 %v70, %v71
    %v73 = vsel %vm65, %v51, 0.0
    %v74 = vrot.slane %v73, 4
    %v75 = vadd.f32 %v73, %v74
    %v76 = vrot.slane %v75, 2
    %v77 = vadd.f32 %v75, %v76
    %v78 = vrot.slane %v77, 1
    %v79 = vadd.f32 %v77, %v78
    %v80 = vsel %vm65, %v52, 0.0
    %v81 = vrot.slane %v80, 4
    %v82 = vadd.f32 %v80, %v81
    %v83 = vrot.slane %v82, 2
    %v84 = vadd.f32 %v82, %v83
    %v85 = vrot.slane %v84, 1
    %v86 = vadd.f32 %v84, %v85
    %v87 = vsel %vm65, %v53, 0.0
    %v88 = vrot.slane %v87, 4
    %v89 = vadd.f32 %v87, %v88
    %v90 = vrot.slane %v89, 2
    %v91 = vadd.f32 %v89, %v90
    %v92 = vrot.slane %v91, 1
    %v93 = vadd.f32 %v91, %v92
    %v94 = vsel %vm65, %v54, 0.0
    %v95 = vrot.slane %v94, 4
    %v96 = vadd.f32 %v94, %v95
    %v97 = vrot.slane %v96, 2
    %v98 = vadd.f32 %v96, %v97
    %v99 = vrot.slane %v98, 1
    %v100 = vadd.f32 %v98, %v99
    %v101 = vsel %vm65, %v55, 0.0
    %v102 = vrot.slane %v101, 4
    %v103 = vadd.f32 %v101, %v102
    %v104 = vrot.slane %v103, 2
    %v105 = vadd.f32 %v103, %v104
    %v106 = vrot.slane %v105, 1
    %v107 = vadd.f32 %v105, %v106
    %v108 = vsel %vm65, %v56, 0.0
    %v109 = vrot.slane %v108, 4
    %v110 = vadd.f32 %v108, %v109
    %v111 = vrot.slane %v110, 2
    %v112 = vadd.f32 %v110, %v111
    %v113 = vrot.slane %v112, 1
    %v114 = vadd.f32 %v112, %v113
    %v115 = vsel %vm65, %v57, 0.0
    %v116 = vrot.slane %v115, 4
    %v117 = vadd.f32 %v115, %v116
    %v118 = vrot.slane %v117, 2
    %v119 = vadd.f32 %v117, %v118
    %v120 = vrot.slane %v119, 1
    %v121 = vadd.f32 %v119, %v120
    %v122 = vld [vmem:[#allocation6] sm:$0xff]
    %v123 = vld [vmem:[#allocation6 + $0x8] sm:$0xff]
    %v124 = vld [vmem:[#allocation6 + $0x10] sm:$0xff]
    %v125 = vld [vmem:[#allocation6 + $0x18] sm:$0xff]
    %v126 = vld [vmem:[%s3] sm:$0x1]
    %v128 = vlaneseq
    %v129 = vshrl.u32 %v128, 7
    %v130 = vsub.s32 0, %v129
    %v131 = vrot.slane %v126, %v130
    %vm141 = vcmask 1041409
    %v142 = vsel %vm141, %v79, %v72
    %vm143 = vcmask 1042434
    %v144 = vsel %vm143, %v86, %v142
    %vm145 = vcmask 1043459
    %v146 = vsel %vm145, %v93, %v144
    %vm147 = vcmask 1044484
    %v148 = vsel %vm147, %v100, %v146
    %vm149 = vcmask 1045509
    %v150 = vsel %vm149, %v107, %v148
    %vm151 = vcmask 1046534
    %v152 = vsel %vm151, %v114, %v150
    %vm153 = vcmask 1047559
    %v154 = vsel %vm153, %v121, %v152
    %v155 = vsel %vm65, %v154, 0
    %157 = vmatprep.subr.mxu0 0.0
    %158 = vmatpush1.msra.mxu0 %v122
    %159 = vmatprep.subr.mxu0 0.0
    %160 = vmatpush1.msra.mxu0 %v123
    %161 = vmatprep.subr.mxu0 0.0
    %162 = vmatpush1.msra.mxu0 %v124
    %163 = vmatprep.subr.mxu0 0.0
    %164 = vmatpush1.msra.mxu0 %v125
    %165 = vmatprep.subr.mxu0 0.0
    %166 = vmatpush1.msra.mxu0 0.0
    %167 = vmatprep.subr.mxu0 0.0
    %168 = vmatpush1.msra.mxu0 0.0
    %169 = vmatprep.subr.mxu0 0.0
    %170 = vmatpush1.msra.mxu0 0.0
    %171 = vmatprep.subr.mxu0 0.0
    %172 = vmatpush1.msra.mxu0 0.0
    %173 = vmatprep.subr.mxu0 0.0
    %174 = vmatpush1.msra.mxu0 0.0
    %175 = vmatprep.subr.mxu0 0.0
    %176 = vmatpush1.msra.mxu0 0.0
    %177 = vmatprep.subr.mxu0 0.0
    %178 = vmatpush1.msra.mxu0 0.0
    %179 = vmatprep.subr.mxu0 0.0
    %180 = vmatpush1.msra.mxu0 0.0
    %181 = vmatprep.subr.mxu0 0.0
    %182 = vmatpush1.msra.mxu0 0.0
    %183 = vmatprep.subr.mxu0 0.0
    %184 = vmatpush1.msra.mxu0 0.0
    %185 = vmatprep.subr.mxu0 0.0
    %186 = vmatpush1.msra.mxu0 0.0
    %187 = vmatprep.subr.mxu0 0.0
    %188 = vmatpush1.msra.mxu0 0.0
    %189 = vmatprep.subr.mxu0 0.0
    %190 = vmatpush1.msra.mxu0 0.0
    %191 = vmatprep.subr.mxu0 0.0
    %192 = vmatpush1.msra.mxu0 0.0
    %193 = vmatprep.subr.mxu0 0.0
    %194 = vmatpush1.msra.mxu0 0.0
    %195 = vmatprep.subr.mxu0 0.0
    %196 = vmatpush1.msra.mxu0 0.0
    %197 = vmatprep.subr.mxu0 0.0
    %198 = vmatpush1.msra.mxu0 0.0
    %199 = vmatprep.subr.mxu0 0.0
    %200 = vmatpush1.msra.mxu0 0.0
    %201 = vmatprep.subr.mxu0 0.0
    %202 = vmatpush1.msra.mxu0 0.0
    %203 = vmatprep.subr.mxu0 0.0
    %204 = vmatpush1.msra.mxu0 0.0
    %205 = vmatprep.subr.mxu0 0.0
    %206 = vmatpush1.msra.mxu0 0.0
    %207 = vmatprep.subr.mxu0 0.0
    %208 = vmatpush1.msra.mxu0 0.0
    %209 = vmatprep.subr.mxu0 0.0
    %210 = vmatpush1.msra.mxu0 0.0
    %211 = vmatprep.subr.mxu0 0.0
    %212 = vmatpush1.msra.mxu0 0.0
    %213 = vmatprep.subr.mxu0 0.0
    %214 = vmatpush1.msra.mxu0 0.0
    %215 = vmatprep.subr.mxu0 0.0
    %216 = vmatpush1.msra.mxu0 0.0
    %217 = vmatprep.subr.mxu0 0.0
    %218 = vmatpush1.msra.mxu0 0.0
    %219 = vmatprep.subr.mxu0 0.0
    %220 = vmatpush1.msra.mxu0 0.0
    %221 = vmatprep.mubr.f32.mxu0 0.0
    %222 = vmatmul.mubr.f32.gmra.mrb[0].mxu0 %v155
    %v223 = vpop.f32.mrb[0].mxu0
    %v224 = vadd.f32 %v131, %v223
    %v225 = vpop.f32.mrb[0].mxu0
    %226 = vdwg.mxu0
    %s227 = sld [smem:[#allocation2]]
    %v229 = vcombine.high %v224, %v224
    %v231 = vunpack.c.l.s4 1966171168
    %v232 = vunpack.c.0.s8 %v231
    %v233 = vlaneseq
    %v234 = vshrl.u32 %v233, 7
    %v235 = vsub.s32 %v232, %v234
    %v236 = vrot.slane %v224, %v235
    %v238 = vunpack.c.l.s4 1966171168
    %v239 = vunpack.c.0.s8 %v238
    %v240 = vlaneseq
    %v241 = vshrl.u32 %v240, 7
    %v242 = vsub.s32 %v239, %v241
    %v243 = vrot.slane %v229, %v242
    %v244 = vcombine.high %v236, %v236
    %v245 = vcombine.high %v243, %v243
    %v247 = vunpack.c.l.s4 1966171168
    %v248 = vunpack.c.0.s8 %v247
    %v249 = vlaneseq
    %v250 = vshrl.u32 %v249, 7
    %v251 = vsub.s32 %v248, %v250
    %v252 = vrot.slane %v236, %v251
    %v254 = vunpack.c.l.s4 1966171168
    %v255 = vunpack.c.0.s8 %v254
    %v256 = vlaneseq
    %v257 = vshrl.u32 %v256, 7
    %v258 = vsub.s32 %v255, %v257
    %v259 = vrot.slane %v243, %v258
    %v261 = vunpack.c.l.s4 1966171168
    %v262 = vunpack.c.0.s8 %v261
    %v263 = vlaneseq
    %v264 = vshrl.u32 %v263, 7
    %v265 = vsub.s32 %v262, %v264
    %v266 = vrot.slane %v244, %v265
    %v268 = vunpack.c.l.s4 1966171168
    %v269 = vunpack.c.0.s8 %v268
    %v270 = vlaneseq
    %v271 = vshrl.u32 %v270, 7
    %v272 = vsub.s32 %v269, %v271
    %v273 = vrot.slane %v245, %v272
    %v274 = vcombine.high %v252, %v252
    %v275 = vcombine.high %v259, %v259
    %v276 = vcombine.high %v266, %v266
    %v277 = vcombine.high %v273, %v273
    %v278 = vlaneseq
    %v279 = vshrl.u32 %v278, 7
    %v280 = vsub.s32 0, %v279
    %v281 = vrot.slane %v252, %v280
    %v282 = vlaneseq
    %v283 = vshrl.u32 %v282, 7
    %v284 = vsub.s32 0, %v283
    %v285 = vrot.slane %v266, %v284
    %v286 = vlaneseq
    %v287 = vshrl.u32 %v286, 7
    %v288 = vsub.s32 0, %v287
    %v289 = vrot.slane %v274, %v288
    %v290 = vlaneseq
    %v291 = vshrl.u32 %v290, 7
    %v292 = vsub.s32 0, %v291
    %v293 = vrot.slane %v276, %v292
    %v294 = vlaneseq
    %v295 = vshrl.u32 %v294, 7
    %v296 = vsub.s32 0, %v295
    %v297 = vrot.slane %v259, %v296
    %v298 = vlaneseq
    %v299 = vshrl.u32 %v298, 7
    %v300 = vsub.s32 0, %v299
    %v301 = vrot.slane %v273, %v300
    %v302 = vlaneseq
    %v303 = vshrl.u32 %v302, 7
    %v304 = vsub.s32 0, %v303
    %v305 = vrot.slane %v275, %v304
    %v306 = vlaneseq
    %v307 = vshrl.u32 %v306, 7
    %v308 = vsub.s32 0, %v307
    %v309 = vrot.slane %v277, %v308
    %v318 = vmul.f32 %v50, %v281
    %v319 = vmul.f32 %v51, %v285
    %v320 = vmul.f32 %v52, %v289
    %v321 = vmul.f32 %v53, %v293
    %v322 = vmul.f32 %v54, %v297
    %v323 = vmul.f32 %v55, %v301
    %v324 = vmul.f32 %v56, %v305
    %v325 = vmul.f32 %v57, %v309
    %v326 = vsel %vm65, %v318, 0.0
    %327 = vadd.xlane.f32.xlu0 %v326
    %v328 = vpop.xlane.xlu0 %327
    %v329 = vsel %vm65, %v319, 0.0
    %330 = vadd.xlane.f32.xlu0 %v329
    %v331 = vpop.xlane.xlu0 %330
    %v332 = vsel %vm65, %v320, 0.0
    %333 = vadd.xlane.f32.xlu0 %v332
    %v334 = vpop.xlane.xlu0 %333
    %v335 = vsel %vm65, %v321, 0.0
    %336 = vadd.xlane.f32.xlu0 %v335
    %v337 = vpop.xlane.xlu0 %336
    %v338 = vsel %vm65, %v322, 0.0
    %339 = vadd.xlane.f32.xlu0 %v338
    %v340 = vpop.xlane.xlu0 %339
    %v341 = vsel %vm65, %v323, 0.0
    %342 = vadd.xlane.f32.xlu0 %v341
    %v343 = vpop.xlane.xlu0 %342
    %v344 = vsel %vm65, %v324, 0.0
    %345 = vadd.xlane.f32.xlu0 %v344
    %v346 = vpop.xlane.xlu0 %345
    %v347 = vsel %vm65, %v325, 0.0
    %348 = vadd.xlane.f32.xlu0 %v347
    %v349 = vpop.xlane.xlu0 %348
    %v350 = vmul.f32 %v328, 0.17677669
    %v351 = vmul.f32 %v331, 0.17677669
    %v352 = vmul.f32 %v334, 0.17677669
    %v353 = vmul.f32 %v337, 0.17677669
    %v354 = vmul.f32 %v340, 0.17677669
    %v355 = vmul.f32 %v343, 0.17677669
    %v356 = vmul.f32 %v346, 0.17677669
    %v357 = vmul.f32 %v349, 0.17677669
    %v366 = vlaneseq
    %v367 = vshrl.u32 %v366, 7
    %v368 = vsub.s32 %v59, %v367
    %v369 = vrot.slane %v350, %v368
    %v370 = vlaneseq
    %v371 = vshrl.u32 %v370, 7
    %v372 = vsub.s32 %v59, %v371
    %v373 = vrot.slane %v351, %v372
    %v374 = vlaneseq
    %v375 = vshrl.u32 %v374, 7
    %v376 = vsub.s32 %v59, %v375
    %v377 = vrot.slane %v352, %v376
    %v378 = vlaneseq
    %v379 = vshrl.u32 %v378, 7
    %v380 = vsub.s32 %v59, %v379
    %v381 = vrot.slane %v353, %v380
    %v382 = vlaneseq
    %v383 = vshrl.u32 %v382, 7
    %v384 = vsub.s32 %v59, %v383
    %v385 = vrot.slane %v354, %v384
    %v386 = vlaneseq
    %v387 = vshrl.u32 %v386, 7
    %v388 = vsub.s32 %v59, %v387
    %v389 = vrot.slane %v355, %v388
    %v390 = vlaneseq
    %v391 = vshrl.u32 %v390, 7
    %v392 = vsub.s32 %v59, %v391
    %v393 = vrot.slane %v356, %v392
    %v394 = vlaneseq
    %v395 = vshrl.u32 %v394, 7
    %v396 = vsub.s32 %v59, %v395
    %v397 = vrot.slane %v357, %v396
    %v398 = vsel %vm141, %v373, %v369
    %v399 = vsel %vm143, %v377, %v398
    %v400 = vsel %vm145, %v381, %v399
    %v401 = vsel %vm147, %v385, %v400
    %v402 = vsel %vm149, %v389, %v401
    %v403 = vsel %vm151, %v393, %v402
    %v404 = vsel %vm153, %v397, %v403
    %v406 = vsel %vm64, %v404, -inf
    %vm407 = vcmask 64512
    %v408 = vsel %vm407, %v406, -inf
    %409 = vmax.xlane.f32.xlu0 %v408
    %v410 = vpop.xlane.xlu0 %409
    %v411 = vmax.f32 %v410, -1e+30
    %v412 = vsub.f32 %v406, %v411
    %v413 = vmul.f32 %v412, 1.442695
    %v414 = vpow.pop %v413
    %v415 = vsel %vm407, %v414, 0.0
    %416 = vadd.xlane.f32.xlu0 %v415
    %v417 = vpop.xlane.xlu0 %416
    %v418 = vmax.f32 %v417, 1e-20
    %v419 = vrcp.pop %v418
    %v420 = vmul.f32 %v414, %v419
    %v421 = vstv %s227
    %v422 = vmul.f32 %v421, %v420
    %s423 = ssub.f32 1.0, %s227
    %424 = vrot.lane.b32.xlu0 %v281, 96
    %v425 = vpop.permute.xlu0 %424
    %426 = vrot.lane.b32.xlu0 %v285, 96
    %v427 = vpop.permute.xlu0 %426
    %428 = vrot.lane.b32.xlu0 %v289, 96
    %v429 = vpop.permute.xlu0 %428
    %430 = vrot.lane.b32.xlu0 %v293, 96
    %v431 = vpop.permute.xlu0 %430
    %432 = vrot.lane.b32.xlu0 %v297, 96
    %v433 = vpop.permute.xlu0 %432
    %434 = vrot.lane.b32.xlu0 %v301, 96
    %v435 = vpop.permute.xlu0 %434
    %436 = vrot.lane.b32.xlu0 %v305, 96
    %v437 = vpop.permute.xlu0 %436
    %438 = vrot.lane.b32.xlu0 %v309, 96
    %v439 = vpop.permute.xlu0 %438
    %v448 = vmul.f32 %v50, %v425
    %v449 = vmul.f32 %v51, %v427
    %v450 = vmul.f32 %v52, %v429
    %v451 = vmul.f32 %v53, %v431
    %v452 = vmul.f32 %v54, %v433
    %v453 = vmul.f32 %v55, %v435
    %v454 = vmul.f32 %v56, %v437
    %v455 = vmul.f32 %v57, %v439
    %v456 = vsel %vm65, %v448, 0.0
    %457 = vadd.xlane.f32.xlu0 %v456
    %v458 = vpop.xlane.xlu0 %457
    %v459 = vsel %vm65, %v449, 0.0
    %460 = vadd.xlane.f32.xlu0 %v459
    %v461 = vpop.xlane.xlu0 %460
    %v462 = vsel %vm65, %v450, 0.0
    %463 = vadd.xlane.f32.xlu0 %v462
    %v464 = vpop.xlane.xlu0 %463
    %v465 = vsel %vm65, %v451, 0.0
    %466 = vadd.xlane.f32.xlu0 %v465
    %v467 = vpop.xlane.xlu0 %466
    %v468 = vsel %vm65, %v452, 0.0
    %469 = vadd.xlane.f32.xlu0 %v468
    %v470 = vpop.xlane.xlu0 %469
    %v471 = vsel %vm65, %v453, 0.0
    %472 = vadd.xlane.f32.xlu0 %v471
    %v473 = vpop.xlane.xlu0 %472
    %v474 = vsel %vm65, %v454, 0.0
    %475 = vadd.xlane.f32.xlu0 %v474
    %v476 = vpop.xlane.xlu0 %475
    %v477 = vsel %vm65, %v455, 0.0
    %478 = vadd.xlane.f32.xlu0 %v477
    %v479 = vpop.xlane.xlu0 %478
    %v480 = vmul.f32 %v458, 0.17677669
    %v481 = vmul.f32 %v461, 0.17677669
    %v482 = vmul.f32 %v464, 0.17677669
    %v483 = vmul.f32 %v467, 0.17677669
    %v484 = vmul.f32 %v470, 0.17677669
    %v485 = vmul.f32 %v473, 0.17677669
    %v486 = vmul.f32 %v476, 0.17677669
    %v487 = vmul.f32 %v479, 0.17677669
    %v496 = vlaneseq
    %v497 = vshrl.u32 %v496, 7
    %v498 = vsub.s32 %v59, %v497
    %v499 = vrot.slane %v480, %v498
    %v500 = vlaneseq
    %v501 = vshrl.u32 %v500, 7
    %v502 = vsub.s32 %v59, %v501
    %v503 = vrot.slane %v481, %v502
    %v504 = vlaneseq
    %v505 = vshrl.u32 %v504, 7
    %v506 = vsub.s32 %v59, %v505
    %v507 = vrot.slane %v482, %v506
    %v508 = vlaneseq
    %v509 = vshrl.u32 %v508, 7
    %v510 = vsub.s32 %v59, %v509
    %v511 = vrot.slane %v483, %v510
    %v512 = vlaneseq
    %v513 = vshrl.u32 %v512, 7
    %v514 = vsub.s32 %v59, %v513
    %v515 = vrot.slane %v484, %v514
    %v516 = vlaneseq
    %v517 = vshrl.u32 %v516, 7
    %v518 = vsub.s32 %v59, %v517
    %v519 = vrot.slane %v485, %v518
    %v520 = vlaneseq
    %v521 = vshrl.u32 %v520, 7
    %v522 = vsub.s32 %v59, %v521
    %v523 = vrot.slane %v486, %v522
    %v524 = vlaneseq
    %v525 = vshrl.u32 %v524, 7
    %v526 = vsub.s32 %v59, %v525
    %v527 = vrot.slane %v487, %v526
    %v528 = vsel %vm141, %v503, %v499
    %v529 = vsel %vm143, %v507, %v528
    %v530 = vsel %vm145, %v511, %v529
    %v531 = vsel %vm147, %v515, %v530
    %v532 = vsel %vm149, %v519, %v531
    %v533 = vsel %vm151, %v523, %v532
    %v534 = vsel %vm153, %v527, %v533
    %v536 = vsel %vm64, %v534, -inf
    %v537 = vsel %vm407, %v536, -inf
    %538 = vmax.xlane.f32.xlu0 %v537
    %v539 = vpop.xlane.xlu0 %538
    %v540 = vmax.f32 %v539, -1e+30
    %v541 = vsub.f32 %v536, %v540
    %v542 = vmul.f32 %v541, 1.442695
    %v543 = vpow.pop %v542
    %v544 = vsel %vm407, %v543, 0.0
    %545 = vadd.xlane.f32.xlu0 %v544
    %v546 = vpop.xlane.xlu0 %545
    %v547 = vmax.f32 %v546, 1e-20
    %v548 = vrcp.pop %v547
    %v549 = vmul.f32 %v543, %v548
    %v550 = vstv %s423
    %v551 = vmul.f32 %v550, %v549
    %v552 = vadd.f32 %v422, %v551
    %v553 = vlaneseq
    %v554 = vshrl.u32 %v553, 7
    %v555 = vsub.s32 0, %v554
    %v556 = vrot.slane %v552, %v555
    %558 = vbcast.lane.b32.xlu0 %v556, 256
    %v559 = vpop.permute.xlu0 %558
    %v560 = vlaneseq
    %v561 = vshrl.u32 %v560, 7
    %v562 = vsub.s32 1, %v561
    %v563 = vrot.slane %v552, %v562
    %565 = vbcast.lane.b32.xlu0 %v563, 256
    %v566 = vpop.permute.xlu0 %565
    %v567 = vlaneseq
    %v568 = vshrl.u32 %v567, 7
    %v569 = vsub.s32 2, %v568
    %v570 = vrot.slane %v552, %v569
    %572 = vbcast.lane.b32.xlu0 %v570, 256
    %v573 = vpop.permute.xlu0 %572
    %v574 = vlaneseq
    %v575 = vshrl.u32 %v574, 7
    %v576 = vsub.s32 3, %v575
    %v577 = vrot.slane %v552, %v576
    %579 = vbcast.lane.b32.xlu0 %v577, 256
    %v580 = vpop.permute.xlu0 %579
    %v581 = vlaneseq
    %v582 = vshrl.u32 %v581, 7
    %v583 = vsub.s32 4, %v582
    %v584 = vrot.slane %v552, %v583
    %586 = vbcast.lane.b32.xlu0 %v584, 256
    %v587 = vpop.permute.xlu0 %586
    %v588 = vlaneseq
    %v589 = vshrl.u32 %v588, 7
    %v590 = vsub.s32 5, %v589
    %v591 = vrot.slane %v552, %v590
    %593 = vbcast.lane.b32.xlu0 %v591, 256
    %v594 = vpop.permute.xlu0 %593
    %v595 = vlaneseq
    %v596 = vshrl.u32 %v595, 7
    %v597 = vsub.s32 6, %v596
    %v598 = vrot.slane %v552, %v597
    %600 = vbcast.lane.b32.xlu0 %v598, 256
    %v601 = vpop.permute.xlu0 %600
    %v602 = vlaneseq
    %v603 = vshrl.u32 %v602, 7
    %v604 = vsub.s32 7, %v603
    %v605 = vrot.slane %v552, %v604
    %607 = vbcast.lane.b32.xlu0 %v605, 256
    %v608 = vpop.permute.xlu0 %607
    %v609 = vmul.f32 %v50, %v559
    %v610 = vmul.f32 %v51, %v566
    %v611 = vmul.f32 %v52, %v573
    %v612 = vmul.f32 %v53, %v580
    %v613 = vmul.f32 %v54, %v587
    %v614 = vmul.f32 %v55, %v594
    %v615 = vmul.f32 %v56, %v601
    %v616 = vmul.f32 %v57, %v608
    %v617 = vsel %vm65, %v609, 0.0
    %v618 = vrot.slane %v617, 4
    %v619 = vadd.f32 %v617, %v618
    %v620 = vrot.slane %v619, 2
    %v621 = vadd.f32 %v619, %v620
    %v622 = vrot.slane %v621, 1
    %v623 = vadd.f32 %v621, %v622
    %v624 = vsel %vm65, %v610, 0.0
    %v625 = vrot.slane %v624, 4
    %v626 = vadd.f32 %v624, %v625
    %v627 = vrot.slane %v626, 2
    %v628 = vadd.f32 %v626, %v627
    %v629 = vrot.slane %v628, 1
    %v630 = vadd.f32 %v628, %v629
    %v631 = vsel %vm65, %v611, 0.0
    %v632 = vrot.slane %v631, 4
    %v633 = vadd.f32 %v631, %v632
    %v634 = vrot.slane %v633, 2
    %v635 = vadd.f32 %v633, %v634
    %v636 = vrot.slane %v635, 1
    %v637 = vadd.f32 %v635, %v636
    %v638 = vsel %vm65, %v612, 0.0
    %v639 = vrot.slane %v638, 4
    %v640 = vadd.f32 %v638, %v639
    %v641 = vrot.slane %v640, 2
    %v642 = vadd.f32 %v640, %v641
    %v643 = vrot.slane %v642, 1
    %v644 = vadd.f32 %v642, %v643
    %v645 = vsel %vm65, %v613, 0.0
    %v646 = vrot.slane %v645, 4
    %v647 = vadd.f32 %v645, %v646
    %v648 = vrot.slane %v647, 2
    %v649 = vadd.f32 %v647, %v648
    %v650 = vrot.slane %v649, 1
    %v651 = vadd.f32 %v649, %v650
    %v652 = vsel %vm65, %v614, 0.0
    %v653 = vrot.slane %v652, 4
    %v654 = vadd.f32 %v652, %v653
    %v655 = vrot.slane %v654, 2
    %v656 = vadd.f32 %v654, %v655
    %v657 = vrot.slane %v656, 1
    %v658 = vadd.f32 %v656, %v657
    %v659 = vsel %vm65, %v615, 0.0
    %v660 = vrot.slane %v659, 4
    %v661 = vadd.f32 %v659, %v660
    %v662 = vrot.slane %v661, 2
    %v663 = vadd.f32 %v661, %v662
    %v664 = vrot.slane %v663, 1
    %v665 = vadd.f32 %v663, %v664
    %v666 = vsel %vm65, %v616, 0.0
    %v667 = vrot.slane %v666, 4
    %v668 = vadd.f32 %v666, %v667
    %v669 = vrot.slane %v668, 2
    %v670 = vadd.f32 %v668, %v669
    %v671 = vrot.slane %v670, 1
    %v672 = vadd.f32 %v670, %v671
    %v681 = vsel %vm141, %v630, %v623
    %v682 = vsel %vm143, %v637, %v681
    %v683 = vsel %vm145, %v644, %v682
    %v684 = vsel %vm147, %v651, %v683
    %v685 = vsel %vm149, %v658, %v684
    %v686 = vsel %vm151, %v665, %v685
    %v687 = vsel %vm153, %v672, %v686
    %689 = vst.msk [vmem:[#allocation8] sm:$0xff] %vm65, %v687
    // Predicated region
    $region30: #{tpu_custom_call.1} parent=1 // pred_check
      _
    $region31: #{tpu_custom_call.1} parent=1 // pred_check_branch
      %691 = sbr.rel (0) target = $region33
    $region32: #{tpu_custom_call.1} parent=1 // pred_region
      %s693 = ssub.s32 128, 128
      %694 = vsyncadd [#allocation5], %s693
      %s696 = sshll.u32 [#allocation8], 4
      %s697 = int_to_ptr.vmem [resolvable:$true] %s696
      %699 = dma.vmem_to_hbm [thread:$0]  %s697, 128, %s5, [#allocation5]
    $region33: #{tpu_custom_call.1} parent=1 // pred_fallthru
      _
    // Predicated region
    $region34: #{tpu_custom_call.1} parent=1 // pred_check
      _
    $region35: #{tpu_custom_call.1} parent=1 // pred_check_branch
      %701 = sbr.rel (0) target = $region37
    $region36: #{tpu_custom_call.1} parent=1 // pred_region
      %702 = dma.done [#allocation5], 128
    $region37: #{tpu_custom_call.1} parent=1 // pred_fallthru
      _
    %703 = vsyncpa [#allocation4], 1
    %704 = vsyncpa [#allocation7], 1
    %705 = vsyncpa [#allocation5], 1

</llo_original>
